<compile_context>
chip_gen: v5e
topology: v5e:2x2
jax: 0.10.0
libtpu: 0.0.40
codegen_flags: <defaults>
</compile_context>

<pallas_src>
import jax
import jax.numpy as jnp
from jax.experimental import pallas as pl
from jax.experimental.pallas import tpu as pltpu


def mlp_kernel(x_ref, w1_ref, b1_ref, w2_ref, b2_ref, w3_ref, b3_ref, o_ref):
    # x_ref: (block_m, in_dim); weights in (in, out) layout; biases as (1, out) rows.
    x = x_ref[...]
    # Layer 1: ReLU(x @ W1 + b1)            (Dropout = identity at inference)
    h1 = jnp.dot(x, w1_ref[...], preferred_element_type=jnp.float32)
    h1 = jnp.maximum(h1 + b1_ref[...], 0.0)
    # Layer 2: ReLU(h1 @ W2 + b2)           (Dropout = identity at inference)
    h2 = jnp.dot(h1, w2_ref[...], preferred_element_type=jnp.float32)
    h2 = jnp.maximum(h2 + b2_ref[...], 0.0)
    # Layer 3: h2 @ W3 + b3
    out = jnp.dot(h2, w3_ref[...], preferred_element_type=jnp.float32) + b3_ref[...]
    o_ref[...] = out.astype(o_ref.dtype)


def multiclass_therapy_forward(x, params, *, block_m=16384):
    """x: (N, in_dim) f32.  params: PyTorch-layout w{k}: (out,in), b{k}: (out,)."""
    n, in_dim = x.shape
    w1, b1, w2, b2, w3, b3 = (params[k] for k in ("w1", "b1", "w2", "b2", "w3", "b3"))
    h1d, h2d, out_dim = w1.shape[0], w2.shape[0], w3.shape[0]

    # Row-tile size: multiple of 8 (sublane).  Shrink so the grid keeps >= 2 steps whenever
    # the batch allows it (v7x megacore shards the "parallel" axis across both TensorCores).
    block_m = max(8, (block_m // 8) * 8)
    n8 = ((n + 7) // 8) * 8
    if n8 > 8:
        half = (((n8 + 1) // 2) + 7) // 8 * 8   # ceil(n8/2) rounded up to a multiple of 8
        block_m = min(block_m, half)
    else:
        block_m = 8
    grid = (pl.cdiv(n, block_m),)

    # Tiny (~3 KB) weights presented in matmul-natural (in, out) layout; biases as (1, out).
    w1t, w2t, w3t = w1.T, w2.T, w3.T
    b1r, b2r, b3r = b1.reshape(1, h1d), b2.reshape(1, h2d), b3.reshape(1, out_dim)

    # Constant (0,0) index_maps -> weights/biases stay VMEM-resident across the grid.
    full = lambda shape: pl.BlockSpec(shape, lambda i: (0, 0))

    return pl.pallas_call(
        mlp_kernel,
        out_shape=jax.ShapeDtypeStruct((n, out_dim), jnp.float32),
        grid_spec=pltpu.PrefetchScalarGridSpec(
            num_scalar_prefetch=0,
            grid=grid,
            in_specs=[
                pl.BlockSpec((block_m, in_dim), lambda i: (i, 0)),  # x row tile (contiguous DMA)
                full((in_dim, h1d)),   # W1^T  (in_dim, 32)
                full((1, h1d)),        # b1
                full((h1d, h2d)),      # W2^T  (32, 16)
                full((1, h2d)),        # b2
                full((h2d, out_dim)),  # W3^T  (16, out_dim)
                full((1, out_dim)),    # b3
            ],
            out_specs=pl.BlockSpec((block_m, out_dim), lambda i: (i, 0)),
        ),
        compiler_params=pltpu.CompilerParams(
            dimension_semantics=("parallel",),     # shard batch tiles across TCs on v7x
            vmem_limit_bytes=32 * 1024 * 1024,     # headroom for block_m sweeps, safe on all gens
        ),
    )(x.astype(jnp.float32), w1t, b1r, w2t, b2r, w3t, b3r)


def init_params(key, in_dim, out_dim):
    """PyTorch nn.Linear default init: uniform(+-1/sqrt(fan_in)); (out,in) weights."""
    dims = [(in_dim, 32), (32, 16), (16, out_dim)]
    params = {}
    keys = jax.random.split(key, 2 * len(dims))
    for idx, (fi, fo) in enumerate(dims):
        bound = float(fi) ** -0.5
        params[f"w{idx + 1}"] = jax.random.uniform(
            keys[2 * idx], (fo, fi), jnp.float32, -bound, bound
        )
        params[f"b{idx + 1}"] = jax.random.uniform(
            keys[2 * idx + 1], (fo,), jnp.float32, -bound, bound
        )
    return params


if __name__ == "__main__":
    key = jax.random.PRNGKey(0)
    in_dim, out_dim, batch = 16, 4, 300  # batch not a multiple of the tile -> ragged tail path

    kx, kp = jax.random.split(key)
    x = jax.random.normal(kx, (batch, in_dim), dtype=jnp.float32)
    params = init_params(kp, in_dim, out_dim)

    # Small block_m here so the self-test exercises a multi-step grid (grid=3) and the
    # partial last block; production default is block_m=16384.
    out = multiclass_therapy_forward(x, params, block_m=128)
    out = jax.block_until_ready(out)

    # Pure-JAX reference (eval-mode forward, PyTorch weight layout).
    h1 = jnp.maximum(x @ params["w1"].T + params["b1"], 0.0)
    h2 = jnp.maximum(h1 @ params["w2"].T + params["b2"], 0.0)
    ref = h2 @ params["w3"].T + params["b3"]

    assert out.shape == (batch, out_dim)
    assert jnp.allclose(out, ref, atol=1e-4, rtol=1e-4), float(jnp.max(jnp.abs(out - ref)))

    print("KERNEL_OK")
</pallas_src>

<mosaic_0001>
module attributes {stable_mosaic.version = 11 : i64} {
  func.func @mlp_kernel(%arg0: i32, %arg1: memref<128x16xf32, #tpu.memory_space<vmem>>, %arg2: memref<16x32xf32, #tpu.memory_space<vmem>>, %arg3: memref<1x32xf32, #tpu.memory_space<vmem>>, %arg4: memref<32x16xf32, #tpu.memory_space<vmem>>, %arg5: memref<1x16xf32, #tpu.memory_space<vmem>>, %arg6: memref<16x4xf32, #tpu.memory_space<vmem>>, %arg7: memref<1x4xf32, #tpu.memory_space<vmem>>, %arg8: memref<128x4xf32, #tpu.memory_space<vmem>>) attributes {dimension_semantics = [#tpu.dimension_semantics<parallel>], iteration_bounds = array<i64: 3>, scalar_prefetch = 0 : i64, scratch_operands = 0 : i64, tpu.core_type = #tpu.core_type<tc>, window_params = [{transform_indices = @transform_0, window_bounds = array<i64: 128, 16>}, {pipeline_mode = #tpu.pipeline_mode<synchronous>, transform_indices = @transform_1, window_bounds = array<i64: 16, 32>}, {pipeline_mode = #tpu.pipeline_mode<synchronous>, transform_indices = @transform_2, window_bounds = array<i64: 1, 32>}, {pipeline_mode = #tpu.pipeline_mode<synchronous>, transform_indices = @transform_3, window_bounds = array<i64: 32, 16>}, {pipeline_mode = #tpu.pipeline_mode<synchronous>, transform_indices = @transform_4, window_bounds = array<i64: 1, 16>}, {pipeline_mode = #tpu.pipeline_mode<synchronous>, transform_indices = @transform_5, window_bounds = array<i64: 16, 4>}, {pipeline_mode = #tpu.pipeline_mode<synchronous>, transform_indices = @transform_6, window_bounds = array<i64: 1, 4>}, {transform_indices = @transform_7, window_bounds = array<i64: 128, 4>}]} {
    %c0 = arith.constant 0 : index
    %c0_0 = arith.constant 0 : index
    %0 = vector.load %arg1[%c0, %c0_0] : memref<128x16xf32, #tpu.memory_space<vmem>>, vector<128x16xf32>
    %c0_1 = arith.constant 0 : index
    %c0_2 = arith.constant 0 : index
    %1 = vector.load %arg2[%c0_1, %c0_2] : memref<16x32xf32, #tpu.memory_space<vmem>>, vector<16x32xf32>
    %cst = arith.constant dense<0.000000e+00> : vector<128x32xf32>
    %2 = tpu.matmul %0, %1, %cst {dimension_numbers = #tpu.dot_dimension_numbers<[1], [0], [0], [1], [0, 0, 1, 1], [], []>} : vector<128x16xf32>, vector<16x32xf32>, vector<128x32xf32> -> vector<128x32xf32>
    %c0_3 = arith.constant 0 : index
    %c0_4 = arith.constant 0 : index
    %3 = vector.load %arg3[%c0_3, %c0_4] : memref<1x32xf32, #tpu.memory_space<vmem>>, vector<1x32xf32>
    %4 = vector.broadcast %3 : vector<1x32xf32> to vector<128x32xf32>
    %5 = arith.addf %2, %4 : vector<128x32xf32>
    %cst_5 = arith.constant 0.000000e+00 : f32
    %6 = vector.broadcast %cst_5 : f32 to vector<128x32xf32>
    %7 = arith.maximumf %5, %6 : vector<128x32xf32>
    %c0_6 = arith.constant 0 : index
    %c0_7 = arith.constant 0 : index
    %8 = vector.load %arg4[%c0_6, %c0_7] : memref<32x16xf32, #tpu.memory_space<vmem>>, vector<32x16xf32>
    %cst_8 = arith.constant dense<0.000000e+00> : vector<128x16xf32>
    %9 = tpu.matmul %7, %8, %cst_8 {dimension_numbers = #tpu.dot_dimension_numbers<[1], [0], [0], [1], [0, 0, 1, 1], [], []>} : vector<128x32xf32>, vector<32x16xf32>, vector<128x16xf32> -> vector<128x16xf32>
    %c0_9 = arith.constant 0 : index
    %c0_10 = arith.constant 0 : index
    %10 = vector.load %arg5[%c0_9, %c0_10] : memref<1x16xf32, #tpu.memory_space<vmem>>, vector<1x16xf32>
    %11 = vector.broadcast %10 : vector<1x16xf32> to vector<128x16xf32>
    %12 = arith.addf %9, %11 : vector<128x16xf32>
    %cst_11 = arith.constant 0.000000e+00 : f32
    %13 = vector.broadcast %cst_11 : f32 to vector<128x16xf32>
    %14 = arith.maximumf %12, %13 : vector<128x16xf32>
    %c0_12 = arith.constant 0 : index
    %c0_13 = arith.constant 0 : index
    %15 = vector.load %arg6[%c0_12, %c0_13] : memref<16x4xf32, #tpu.memory_space<vmem>>, vector<16x4xf32>
    %cst_14 = arith.constant dense<0.000000e+00> : vector<128x4xf32>
    %16 = tpu.matmul %14, %15, %cst_14 {dimension_numbers = #tpu.dot_dimension_numbers<[1], [0], [0], [1], [0, 0, 1, 1], [], []>} : vector<128x16xf32>, vector<16x4xf32>, vector<128x4xf32> -> vector<128x4xf32>
    %c0_15 = arith.constant 0 : index
    %c0_16 = arith.constant 0 : index
    %17 = vector.load %arg7[%c0_15, %c0_16] : memref<1x4xf32, #tpu.memory_space<vmem>>, vector<1x4xf32>
    %18 = vector.broadcast %17 : vector<1x4xf32> to vector<128x4xf32>
    %19 = arith.addf %16, %18 : vector<128x4xf32>
    %c0_17 = arith.constant 0 : index
    %c0_18 = arith.constant 0 : index
    %20 = vector.load %arg8[%c0_17, %c0_18] : memref<128x4xf32, #tpu.memory_space<vmem>>, vector<128x4xf32>
    tpu.vector_store %arg8[%c0_17, %c0_18], %19 {strides = array<i32>} : memref<128x4xf32, #tpu.memory_space<vmem>>, vector<128x4xf32>,
    return
  }
  func.func @transform_0(%arg0: i32) -> (i32, i32) {
    %c0_i32 = arith.constant 0 : i32
    %c0_i32_0 = arith.constant 0 : i32
    return %arg0, %c0_i32 : i32, i32
  }
  func.func @transform_1(%arg0: i32) -> (i32, i32) {
    %c0_i32 = arith.constant 0 : i32
    %c0_i32_0 = arith.constant 0 : i32
    %c0_i32_1 = arith.constant 0 : i32
    return %c0_i32, %c0_i32_0 : i32, i32
  }
  func.func @transform_2(%arg0: i32) -> (i32, i32) {
    %c0_i32 = arith.constant 0 : i32
    %c0_i32_0 = arith.constant 0 : i32
    %c0_i32_1 = arith.constant 0 : i32
    return %c0_i32, %c0_i32_0 : i32, i32
  }
  func.func @transform_3(%arg0: i32) -> (i32, i32) {
    %c0_i32 = arith.constant 0 : i32
    %c0_i32_0 = arith.constant 0 : i32
    %c0_i32_1 = arith.constant 0 : i32
    return %c0_i32, %c0_i32_0 : i32, i32
  }
  func.func @transform_4(%arg0: i32) -> (i32, i32) {
    %c0_i32 = arith.constant 0 : i32
    %c0_i32_0 = arith.constant 0 : i32
    %c0_i32_1 = arith.constant 0 : i32
    return %c0_i32, %c0_i32_0 : i32, i32
  }
  func.func @transform_5(%arg0: i32) -> (i32, i32) {
    %c0_i32 = arith.constant 0 : i32
    %c0_i32_0 = arith.constant 0 : i32
    %c0_i32_1 = arith.constant 0 : i32
    return %c0_i32, %c0_i32_0 : i32, i32
  }
  func.func @transform_6(%arg0: i32) -> (i32, i32) {
    %c0_i32 = arith.constant 0 : i32
    %c0_i32_0 = arith.constant 0 : i32
    %c0_i32_1 = arith.constant 0 : i32
    return %c0_i32, %c0_i32_0 : i32, i32
  }
  func.func @transform_7(%arg0: i32) -> (i32, i32) {
    %c0_i32 = arith.constant 0 : i32
    %c0_i32_0 = arith.constant 0 : i32
    return %arg0, %c0_i32 : i32, i32
  }
}

</mosaic_0001>

<llo_original>
// kernel: tpu_custom_call.1
$region0: #{tpu_custom_call.1}
  #allocation0 [shape = 'u32[]', space=smem, size = 0x4, offset = 0x4, fixed_abs, tag = 'smem constant byte address 0x4 - core index']
  #allocation1 [shape = 'u32[72,128]{1,0:T(1,128)}', space=vmem, size = 0x9000, scoped, tag = 'internal scratch']
  %s0 = inlined_call_operand.vmem [shape: f32[300,16], index: 0, kind: input, shape index: {}]
  %s1 = inlined_call_operand.vmem [shape: f32[16,32], index: 1, kind: input, shape index: {}]
  %s2 = inlined_call_operand.vmem [shape: f32[1,32], index: 2, kind: input, shape index: {}]
  %s3 = inlined_call_operand.vmem [shape: f32[32,16], index: 3, kind: input, shape index: {}]
  %s4 = inlined_call_operand.vmem [shape: f32[1,16], index: 4, kind: input, shape index: {}]
  %s5 = inlined_call_operand.vmem [shape: f32[16,4], index: 5, kind: input, shape index: {}]
  %s6 = inlined_call_operand.vmem [shape: f32[1,4], index: 6, kind: input, shape index: {}]
  %s7 = inlined_call_operand.vmem [shape: f32[300,4], index: 7, kind: output, shape index: {}]
  %s8 = sld [smem:[#allocation0]]
  $region109: #{tpu_custom_call.1} parent=0
    _
  %s10 = ssub.s32 1, %s8
  %s11 = scalar_select 0, %s10, %s8
  $region1: #{tpu_custom_call.1} parent=0
    #allocation2 [shape = 'u8[131072]{0}', space=vmem, size = 0x20000, scoped, tag = 'output window, operand 0']
    loop: start=0, step=1, limit=5
    $region2: #{tpu_custom_call.1} parent=1 // loop_pre_header
      _
    $region3: #{tpu_custom_call.1} parent=1 // loop_header
      %s13 = sphi 0, %s17
      %p14 = scmp.ge.s32.totalorder %s13, 5
      %s23 = sphi 0, %s25
      %s26 = sphi 0, %s23
      %s27 = sphi 0, %s26
      %s43 = sphi 0, %s27
      %s47 = sphi 0, %s47
      %s49 = sphi 0, %s47
      %s50 = sphi 0, %s49
      %s64 = sphi 0, %s50
      %s68 = sphi 0, %s68
      %s70 = sphi 0, %s68
      %s71 = sphi 0, %s70
      %s85 = sphi 0, %s71
      %s89 = sphi 0, %s89
      %s91 = sphi 0, %s89
      %s92 = sphi 0, %s91
      %s106 = sphi 0, %s92
      %s110 = sphi 0, %s110
      %s112 = sphi 0, %s110
      %s113 = sphi 0, %s112
      %s127 = sphi 0, %s113
      %s131 = sphi 0, %s131
      %s133 = sphi 0, %s131
      %s134 = sphi 0, %s133
      %s148 = sphi 0, %s134
      %s152 = sphi 0, %s152
      %s154 = sphi 0, %s152
      %s155 = sphi 0, %s154
      %s169 = sphi 0, %s155
      %s175 = sphi 0, %s177
      %s178 = sphi 0, %s175
      %s179 = sphi 0, %s178
      %s195 = sphi 0, %s179
    $region4: #{tpu_custom_call.1} parent=1 // loop_header_branch
      %16 = sbr.rel (%p14) target = $region8
    $region5: #{tpu_custom_call.1} parent=1 // loop_body
      %s18 = ssub.s32 %s13, 1
      %s19 = ssub.s32 %s13, 2
      %s20 = sadd.s32 %s13, 1
      %s21 = ssub.s32 %s13, %s20
      %p22 = scmp.eq.s32.totalorder %s21, 0
      %s24 = sadd.s32 %s23, 1
      %s25 = scalar_select %p22, %s23, %s24
      %p28 = pneg %p22
      %p29 = scmp.eq.s32.totalorder %s13, 2
      %p30 = por %p28, %p29
      %p31 = scmp.ne.s32.totalorder %s23, %s26
      %p32 = scmp.eq.s32.totalorder %s13, 0
      %p33 = por %p31, %p32
      %p34 = scmp.ne.s32.totalorder %s23, %s26
      %p35 = scmp.eq.s32.totalorder %s18, 2
      %p36 = por %p34, %p35
      %p37 = scmp.ne.s32.totalorder %s26, %s27
      %p38 = scmp.eq.s32.totalorder %s18, 0
      %p39 = por %p37, %p38
      %p40 = scmp.ne.s32.totalorder %s26, %s27
      %p41 = scmp.eq.s32.totalorder %s19, 2
      %p42 = por %p40, %p41
      %p44 = scmp.ne.s32.totalorder %s27, %s43
      %p45 = scmp.eq.s32.totalorder %s19, 0
      %p46 = por %p44, %p45
      %s48 = sadd.s32 %s47, 1
      %p51 = scmp.eq.s32.totalorder %s13, 2
      %p52 = scmp.ne.s32.totalorder %s47, %s49
      %p53 = scmp.eq.s32.totalorder %s13, 0
      %p54 = por %p52, %p53
      %p55 = scmp.ne.s32.totalorder %s47, %s49
      %p56 = scmp.eq.s32.totalorder %s18, 2
      %p57 = por %p55, %p56
      %p58 = scmp.ne.s32.totalorder %s49, %s50
      %p59 = scmp.eq.s32.totalorder %s18, 0
      %p60 = por %p58, %p59
      %p61 = scmp.ne.s32.totalorder %s49, %s50
      %p62 = scmp.eq.s32.totalorder %s19, 2
      %p63 = por %p61, %p62
      %p65 = scmp.ne.s32.totalorder %s50, %s64
      %p66 = scmp.eq.s32.totalorder %s19, 0
      %p67 = por %p65, %p66
      %s69 = sadd.s32 %s68, 1
      %p72 = scmp.eq.s32.totalorder %s13, 2
      %p73 = scmp.ne.s32.totalorder %s68, %s70
      %p74 = scmp.eq.s32.totalorder %s13, 0
      %p75 = por %p73, %p74
      %p76 = scmp.ne.s32.totalorder %s68, %s70
      %p77 = scmp.eq.s32.totalorder %s18, 2
      %p78 = por %p76, %p77
      %p79 = scmp.ne.s32.totalorder %s70, %s71
      %p80 = scmp.eq.s32.totalorder %s18, 0
      %p81 = por %p79, %p80
      %p82 = scmp.ne.s32.totalorder %s70, %s71
      %p83 = scmp.eq.s32.totalorder %s19, 2
      %p84 = por %p82, %p83
      %p86 = scmp.ne.s32.totalorder %s71, %s85
      %p87 = scmp.eq.s32.totalorder %s19, 0
      %p88 = por %p86, %p87
      %s90 = sadd.s32 %s89, 1
      %p93 = scmp.eq.s32.totalorder %s13, 2
      %p94 = scmp.ne.s32.totalorder %s89, %s91
      %p95 = scmp.eq.s32.totalorder %s13, 0
      %p96 = por %p94, %p95
      %p97 = scmp.ne.s32.totalorder %s89, %s91
      %p98 = scmp.eq.s32.totalorder %s18, 2
      %p99 = por %p97, %p98
      %p100 = scmp.ne.s32.totalorder %s91, %s92
      %p101 = scmp.eq.s32.totalorder %s18, 0
      %p102 = por %p100, %p101
      %p103 = scmp.ne.s32.totalorder %s91, %s92
      %p104 = scmp.eq.s32.totalorder %s19, 2
      %p105 = por %p103, %p104
      %p107 = scmp.ne.s32.totalorder %s92, %s106
      %p108 = scmp.eq.s32.totalorder %s19, 0
      %p109 = por %p107, %p108
      %s111 = sadd.s32 %s110, 1
      %p114 = scmp.eq.s32.totalorder %s13, 2
      %p115 = scmp.ne.s32.totalorder %s110, %s112
      %p116 = scmp.eq.s32.totalorder %s13, 0
      %p117 = por %p115, %p116
      %p118 = scmp.ne.s32.totalorder %s110, %s112
      %p119 = scmp.eq.s32.totalorder %s18, 2
      %p120 = por %p118, %p119
      %p121 = scmp.ne.s32.totalorder %s112, %s113
      %p122 = scmp.eq.s32.totalorder %s18, 0
      %p123 = por %p121, %p122
      %p124 = scmp.ne.s32.totalorder %s112, %s113
      %p125 = scmp.eq.s32.totalorder %s19, 2
      %p126 = por %p124, %p125
      %p128 = scmp.ne.s32.totalorder %s113, %s127
      %p129 = scmp.eq.s32.totalorder %s19, 0
      %p130 = por %p128, %p129
      %s132 = sadd.s32 %s131, 1
      %p135 = scmp.eq.s32.totalorder %s13, 2
      %p136 = scmp.ne.s32.totalorder %s131, %s133
      %p137 = scmp.eq.s32.totalorder %s13, 0
      %p138 = por %p136, %p137
      %p139 = scmp.ne.s32.totalorder %s131, %s133
      %p140 = scmp.eq.s32.totalorder %s18, 2
      %p141 = por %p139, %p140
      %p142 = scmp.ne.s32.totalorder %s133, %s134
      %p143 = scmp.eq.s32.totalorder %s18, 0
      %p144 = por %p142, %p143
      %p145 = scmp.ne.s32.totalorder %s133, %s134
      %p146 = scmp.eq.s32.totalorder %s19, 2
      %p147 = por %p145, %p146
      %p149 = scmp.ne.s32.totalorder %s134, %s148
      %p150 = scmp.eq.s32.totalorder %s19, 0
      %p151 = por %p149, %p150
      %s153 = sadd.s32 %s152, 1
      %p156 = scmp.eq.s32.totalorder %s13, 2
      %p157 = scmp.ne.s32.totalorder %s152, %s154
      %p158 = scmp.eq.s32.totalorder %s13, 0
      %p159 = por %p157, %p158
      %p160 = scmp.ne.s32.totalorder %s152, %s154
      %p161 = scmp.eq.s32.totalorder %s18, 2
      %p162 = por %p160, %p161
      %p163 = scmp.ne.s32.totalorder %s154, %s155
      %p164 = scmp.eq.s32.totalorder %s18, 0
      %p165 = por %p163, %p164
      %p166 = scmp.ne.s32.totalorder %s154, %s155
      %p167 = scmp.eq.s32.totalorder %s19, 2
      %p168 = por %p166, %p167
      %p170 = scmp.ne.s32.totalorder %s155, %s169
      %p171 = scmp.eq.s32.totalorder %s19, 0
      %p172 = por %p170, %p171
      %s173 = ssub.s32 %s13, %s20
      %p174 = scmp.eq.s32.totalorder %s173, 0
      %s176 = sadd.s32 %s175, 1
      %s177 = scalar_select %p174, %s175, %s176
      %p180 = pneg %p174
      %p181 = scmp.eq.s32.totalorder %s13, 2
      %p182 = por %p180, %p181
      %p183 = scmp.ne.s32.totalorder %s175, %s178
      %p184 = scmp.eq.s32.totalorder %s13, 0
      %p185 = por %p183, %p184
      %p186 = scmp.ne.s32.totalorder %s175, %s178
      %p187 = scmp.eq.s32.totalorder %s18, 2
      %p188 = por %p186, %p187
      %p189 = scmp.ne.s32.totalorder %s178, %s179
      %p190 = scmp.eq.s32.totalorder %s18, 0
      %p191 = por %p189, %p190
      %p192 = scmp.ne.s32.totalorder %s178, %s179
      %p193 = scmp.eq.s32.totalorder %s19, 2
      %p194 = por %p192, %p193
      %p196 = scmp.ne.s32.totalorder %s179, %s195
      %p197 = scmp.eq.s32.totalorder %s19, 0
      %p198 = por %p196, %p197
      %p199 = scmp.le.s32.totalorder 1, %s13
      %p200 = scmp.lt.s32.totalorder %s13, 4
      %p201 = pnand %p199, %p200
      %p202 = pneg %p201
      // Predicated region
      $region9: #{tpu_custom_call.1} parent=5 // pred_check
        _
      $region10: #{tpu_custom_call.1} parent=5 // pred_check_branch
        %204 = sbr.rel (%p201) target = $region12
      $region11: #{tpu_custom_call.1} parent=5 // pred_region
        %s205 = ssub.s32 %s13, 1
        // Predicated region
        $region13: #{tpu_custom_call.1} parent=11 // pred_check
          %p206 = pneg %p60
        $region14: #{tpu_custom_call.1} parent=11 // pred_check_branch
          %208 = sbr.rel (%p206) target = $region16
        $region15: #{tpu_custom_call.1} parent=11 // pred_region
          _
        $region16: #{tpu_custom_call.1} parent=11 // pred_fallthru
          _
        // Predicated region
        $region17: #{tpu_custom_call.1} parent=11 // pred_check
          %p209 = pneg %p81
        $region18: #{tpu_custom_call.1} parent=11 // pred_check_branch
          %211 = sbr.rel (%p209) target = $region20
        $region19: #{tpu_custom_call.1} parent=11 // pred_region
          _
        $region20: #{tpu_custom_call.1} parent=11 // pred_fallthru
          _
        // Predicated region
        $region21: #{tpu_custom_call.1} parent=11 // pred_check
          %p212 = pneg %p102
        $region22: #{tpu_custom_call.1} parent=11 // pred_check_branch
          %214 = sbr.rel (%p212) target = $region24
        $region23: #{tpu_custom_call.1} parent=11 // pred_region
          _
        $region24: #{tpu_custom_call.1} parent=11 // pred_fallthru
          _
        // Predicated region
        $region25: #{tpu_custom_call.1} parent=11 // pred_check
          %p215 = pneg %p123
        $region26: #{tpu_custom_call.1} parent=11 // pred_check_branch
          %217 = sbr.rel (%p215) target = $region28
        $region27: #{tpu_custom_call.1} parent=11 // pred_region
          _
        $region28: #{tpu_custom_call.1} parent=11 // pred_fallthru
          _
        // Predicated region
        $region29: #{tpu_custom_call.1} parent=11 // pred_check
          %p218 = pneg %p144
        $region30: #{tpu_custom_call.1} parent=11 // pred_check_branch
          %220 = sbr.rel (%p218) target = $region32
        $region31: #{tpu_custom_call.1} parent=11 // pred_region
          _
        $region32: #{tpu_custom_call.1} parent=11 // pred_fallthru
          _
        // Predicated region
        $region33: #{tpu_custom_call.1} parent=11 // pred_check
          %p221 = pneg %p165
        $region34: #{tpu_custom_call.1} parent=11 // pred_check_branch
          %223 = sbr.rel (%p221) target = $region36
        $region35: #{tpu_custom_call.1} parent=11 // pred_region
          _
        $region36: #{tpu_custom_call.1} parent=11 // pred_fallthru
          _
      $region12: #{tpu_custom_call.1} parent=5 // pred_fallthru
        _
      %p224 = scmp.lt.s32.totalorder %s13, 3
      // Predicated region
      $region37: #{tpu_custom_call.1} parent=5 // pred_check
        %p225 = pneg %p224
      $region38: #{tpu_custom_call.1} parent=5 // pred_check_branch
        %227 = sbr.rel (%p225) target = $region40
      $region39: #{tpu_custom_call.1} parent=5 // pred_region
        // Predicated region
        $region41: #{tpu_custom_call.1} parent=39 // pred_check
          %p228 = pneg %p33
        $region42: #{tpu_custom_call.1} parent=39 // pred_check_branch
          %230 = sbr.rel (%p228) target = $region44
        $region43: #{tpu_custom_call.1} parent=39 // pred_region
          %s231 = smul.u32 16, %s13
          %s232 = ssub.s32 38, %s231
          %p233 = scmp.lt.s32.totalorder %s232, 16
          %s234 = scalar_select %p233, %s232, 16
          %s235 = smul.u32 8, %s234
          %p236 = scmp.lt.s32.totalorder %s231, 37
          %s237 = scalar_select %p236, %s231, 37
          %s238 = smul.addr %s237, 8
          %s239 = scalar_lea.vmem %s0, %s238
          %s240 = smul.u32 16, %s13
          %s241 = ssub.s32 38, %s240
          %p242 = scmp.lt.s32.totalorder %s241, 16
          %s243 = scalar_select %p242, %s241, 16
          %s244 = smul.u32 8, %s243
        $region44: #{tpu_custom_call.1} parent=39 // pred_fallthru
          _
      $region40: #{tpu_custom_call.1} parent=5 // pred_fallthru
        _
      %p245 = scmp.le.s32.totalorder 1, %s13
      %p246 = scmp.lt.s32.totalorder %s13, 4
      %p247 = pnand %p245, %p246
      %p248 = pneg %p247
      // Predicated region
      $region45: #{tpu_custom_call.1} parent=5 // pred_check
        _
      $region46: #{tpu_custom_call.1} parent=5 // pred_check_branch
        %250 = sbr.rel (%p247) target = $region48
      $region47: #{tpu_custom_call.1} parent=5 // pred_region
        %s251 = ssub.s32 %s13, 1
        %s252 = smul.u32 16, %s18
        %s253 = ssub.s32 38, %s252
        %p254 = scmp.lt.s32.totalorder %s253, 16
        %s255 = scalar_select %p254, %s253, 16
        %s256 = smul.u32 8, %s255
        %p257 = scmp.lt.s32.totalorder %s252, 37
        %s258 = scalar_select %p257, %s252, 37
        %s259 = smul.addr %s258, 8
        %s260 = scalar_lea.vmem %s0, %s259
        %p261 = pneg %p39
        %p262 = pneg %p36
        %p263 = pneg %p60
        %p264 = pneg %p57
        %p265 = pneg %p81
        %p266 = pneg %p78
        %p267 = pneg %p102
        %p268 = pneg %p99
        %p269 = pneg %p123
        %p270 = pneg %p120
        %p271 = pneg %p144
        %p272 = pneg %p141
        %p273 = pneg %p165
        %p274 = pneg %p162
        %p275 = pneg %p191
        %p276 = pneg %p188
        %s277 = sand.u32 %s178, 1
        %s278 = sand.u32 %s178, 1
        %s279 = smul.addr %s278, 128
        %s280 = scalar_lea.vmem [#allocation2], %s279
        %s281 = smul.u32 16, %s18
        %s282 = ssub.s32 38, %s281
        %p283 = scmp.lt.s32.totalorder %s282, 16
        %s284 = scalar_select %p283, %s282, 16
        %s285 = smul.u32 8, %s284
        %p286 = scmp.lt.s32.totalorder %s281, 37
        %s287 = scalar_select %p286, %s281, 37
        %s288 = smul.addr %s287, 8
        %s289 = scalar_lea.vmem %s0, %s288
        %s290 = smul.u32 16, %s18
        %s291 = ssub.s32 38, %s290
        %p292 = scmp.lt.s32.totalorder %s291, 16
        %s293 = scalar_select %p292, %s291, 16
        %s294 = smul.u32 8, %s293
        %s295 = smul.u32 16, %s18
        %s296 = ssub.s32 38, %s295
        %p297 = scmp.lt.s32.totalorder %s296, 16
        %s298 = scalar_select %p297, %s296, 16
        %s299 = smul.u32 8, %s298
        %v300 = vld [vmem:[%s289] sm:$0xff]
        %v301 = vld [vmem:[%s289 + $0x8] sm:$0xff]
        %v302 = vld [vmem:[%s289 + $0x10] sm:$0xff]
        %v303 = vld [vmem:[%s289 + $0x18] sm:$0xff]
        %v304 = vld [vmem:[%s289 + $0x20] sm:$0xff]
        %v305 = vld [vmem:[%s289 + $0x28] sm:$0xff]
        %v306 = vld [vmem:[%s289 + $0x30] sm:$0xff]
        %v307 = vld [vmem:[%s289 + $0x38] sm:$0xff]
        %v308 = vld [vmem:[%s289 + $0x40] sm:$0xff]
        %v309 = vld [vmem:[%s289 + $0x48] sm:$0xff]
        %v310 = vld [vmem:[%s289 + $0x50] sm:$0xff]
        %v311 = vld [vmem:[%s289 + $0x58] sm:$0xff]
        %v312 = vld [vmem:[%s289 + $0x60] sm:$0xff]
        %v313 = vld [vmem:[%s289 + $0x68] sm:$0xff]
        %v314 = vld [vmem:[%s289 + $0x70] sm:$0xff]
        %v315 = vld [vmem:[%s289 + $0x78] sm:$0xff]
        %v316 = vld [vmem:[%s1] sm:$0xff]
        %v317 = vld [vmem:[%s1 + $0x8] sm:$0xff]
        %v318 = vld [vmem:[%s2] sm:$0x1]
        %v320 = vperm.slane %v318, 0
        %vm322 = vcmask 130048
        %v324 = vsel %vm322, %v300, 0
        %v327 = vsel %vm322, %v301, 0
        %v330 = vsel %vm322, %v302, 0
        %v333 = vsel %vm322, %v303, 0
        %v336 = vsel %vm322, %v304, 0
        %v339 = vsel %vm322, %v305, 0
        %v342 = vsel %vm322, %v306, 0
        %v345 = vsel %vm322, %v307, 0
        %v348 = vsel %vm322, %v308, 0
        %v351 = vsel %vm322, %v309, 0
        %v354 = vsel %vm322, %v310, 0
        %v357 = vsel %vm322, %v311, 0
        %v360 = vsel %vm322, %v312, 0
        %v363 = vsel %vm322, %v313, 0
        %v366 = vsel %vm322, %v314, 0
        %v369 = vsel %vm322, %v315, 0
        %371 = vmatpush.msra.mxu0 0.0
        %372 = vmatpush.msra.mxu0 0.0
        %373 = vmatpush.msra.mxu0 0.0
        %374 = vmatpush.msra.mxu0 0.0
        %375 = vmatpush.msra.mxu0 0.0
        %376 = vmatpush.msra.mxu0 0.0
        %377 = vmatpush.msra.mxu0 0.0
        %378 = vmatpush.msra.mxu0 0.0
        %379 = vmatpush.msra.mxu0 0.0
        %380 = vmatpush.msra.mxu0 0.0
        %381 = vmatpush.msra.mxu0 0.0
        %382 = vmatpush.msra.mxu0 0.0
        %383 = vmatpush.msra.mxu0 0.0
        %384 = vmatpush.msra.mxu0 0.0
        %385 = vmatpush.msra.mxu0 %v317
        %386 = vmatpush.msra.mxu0 %v316
        %387 = vmatmul.f32.gmra.mxu0 %v324
        %v388 = vpop.f32.mrf.mxu0
        %v389 = vadd.f32 %v320, %v388
        %390 = vmatmul.f32.gmra.mxu0 %v327
        %v391 = vpop.f32.mrf.mxu0
        %v392 = vadd.f32 %v320, %v391
        %393 = vmatmul.f32.gmra.mxu0 %v330
        %v394 = vpop.f32.mrf.mxu0
        %v395 = vadd.f32 %v320, %v394
        %396 = vmatmul.f32.gmra.mxu0 %v333
        %v397 = vpop.f32.mrf.mxu0
        %v398 = vadd.f32 %v320, %v397
        %399 = vmatmul.f32.gmra.mxu0 %v336
        %v400 = vpop.f32.mrf.mxu0
        %v401 = vadd.f32 %v320, %v400
        %402 = vmatmul.f32.gmra.mxu0 %v339
        %v403 = vpop.f32.mrf.mxu0
        %v404 = vadd.f32 %v320, %v403
        %405 = vmatmul.f32.gmra.mxu0 %v342
        %v406 = vpop.f32.mrf.mxu0
        %v407 = vadd.f32 %v320, %v406
        %408 = vmatmul.f32.gmra.mxu0 %v345
        %v409 = vpop.f32.mrf.mxu0
        %v410 = vadd.f32 %v320, %v409
        %411 = vmatmul.f32.gmra.mxu0 %v348
        %v412 = vpop.f32.mrf.mxu0
        %v413 = vadd.f32 %v320, %v412
        %414 = vmatmul.f32.gmra.mxu0 %v351
        %v415 = vpop.f32.mrf.mxu0
        %v416 = vadd.f32 %v320, %v415
        %417 = vmatmul.f32.gmra.mxu0 %v354
        %v418 = vpop.f32.mrf.mxu0
        %v419 = vadd.f32 %v320, %v418
        %420 = vmatmul.f32.gmra.mxu0 %v357
        %v421 = vpop.f32.mrf.mxu0
        %v422 = vadd.f32 %v320, %v421
        %423 = vmatmul.f32.gmra.mxu0 %v360
        %v424 = vpop.f32.mrf.mxu0
        %v425 = vadd.f32 %v320, %v424
        %426 = vmatmul.f32.gmra.mxu0 %v363
        %v427 = vpop.f32.mrf.mxu0
        %v428 = vadd.f32 %v320, %v427
        %429 = vmatmul.f32.gmra.mxu0 %v366
        %v430 = vpop.f32.mrf.mxu0
        %v431 = vadd.f32 %v320, %v430
        %432 = vmatmul.f32.gmra.mxu0 %v369
        %v433 = vpop.f32.mrf.mxu0
        %v434 = vadd.f32 %v320, %v433
        %435 = vdwg.mxu0
        %v436 = vmax.f32 %v389, 0.0
        %v437 = vmax.f32 %v392, 0.0
        %v438 = vmax.f32 %v395, 0.0
        %v439 = vmax.f32 %v398, 0.0
        %v440 = vmax.f32 %v401, 0.0
        %v441 = vmax.f32 %v404, 0.0
        %v442 = vmax.f32 %v407, 0.0
        %v443 = vmax.f32 %v410, 0.0
        %v444 = vmax.f32 %v413, 0.0
        %v445 = vmax.f32 %v416, 0.0
        %v446 = vmax.f32 %v419, 0.0
        %v447 = vmax.f32 %v422, 0.0
        %v448 = vmax.f32 %v425, 0.0
        %v449 = vmax.f32 %v428, 0.0
        %v450 = vmax.f32 %v431, 0.0
        %v451 = vmax.f32 %v434, 0.0
        %v452 = vld [vmem:[%s3] sm:$0xff]
        %v453 = vld [vmem:[%s3 + $0x8] sm:$0xff]
        %v454 = vld [vmem:[%s3 + $0x10] sm:$0xff]
        %v455 = vld [vmem:[%s3 + $0x18] sm:$0xff]
        %v456 = vld [vmem:[%s4] sm:$0x1]
        %v458 = vperm.slane %v456, 0
        %vm460 = vcmask 261120
        %v462 = vsel %vm460, %v436, 0
        %v465 = vsel %vm460, %v437, 0
        %v468 = vsel %vm460, %v438, 0
        %v471 = vsel %vm460, %v439, 0
        %v474 = vsel %vm460, %v440, 0
        %v477 = vsel %vm460, %v441, 0
        %v480 = vsel %vm460, %v442, 0
        %v483 = vsel %vm460, %v443, 0
        %v486 = vsel %vm460, %v444, 0
        %v489 = vsel %vm460, %v445, 0
        %v492 = vsel %vm460, %v446, 0
        %v495 = vsel %vm460, %v447, 0
        %v498 = vsel %vm460, %v448, 0
        %v501 = vsel %vm460, %v449, 0
        %v504 = vsel %vm460, %v450, 0
        %v507 = vsel %vm460, %v451, 0
        %509 = vmatpush.msra.mxu0 0.0
        %510 = vmatpush.msra.mxu0 0.0
        %511 = vmatpush.msra.mxu0 0.0
        %512 = vmatpush.msra.mxu0 0.0
        %513 = vmatpush.msra.mxu0 0.0
        %514 = vmatpush.msra.mxu0 0.0
        %515 = vmatpush.msra.mxu0 0.0
        %516 = vmatpush.msra.mxu0 0.0
        %517 = vmatpush.msra.mxu0 0.0
        %518 = vmatpush.msra.mxu0 0.0
        %519 = vmatpush.msra.mxu0 0.0
        %520 = vmatpush.msra.mxu0 0.0
        %521 = vmatpush.msra.mxu0 %v455
        %522 = vmatpush.msra.mxu0 %v454
        %523 = vmatpush.msra.mxu0 %v453
        %524 = vmatpush.msra.mxu0 %v452
        %525 = vmatmul.f32.gmra.mxu0 %v462
        %v526 = vpop.f32.mrf.mxu0
        %v527 = vadd.f32 %v458, %v526
        %528 = vmatmul.f32.gmra.mxu0 %v465
        %v529 = vpop.f32.mrf.mxu0
        %v530 = vadd.f32 %v458, %v529
        %531 = vmatmul.f32.gmra.mxu0 %v468
        %v532 = vpop.f32.mrf.mxu0
        %v533 = vadd.f32 %v458, %v532
        %534 = vmatmul.f32.gmra.mxu0 %v471
        %v535 = vpop.f32.mrf.mxu0
        %v536 = vadd.f32 %v458, %v535
        %537 = vmatmul.f32.gmra.mxu0 %v474
        %v538 = vpop.f32.mrf.mxu0
        %v539 = vadd.f32 %v458, %v538
        %540 = vmatmul.f32.gmra.mxu0 %v477
        %v541 = vpop.f32.mrf.mxu0
        %v542 = vadd.f32 %v458, %v541
        %543 = vmatmul.f32.gmra.mxu0 %v480
        %v544 = vpop.f32.mrf.mxu0
        %v545 = vadd.f32 %v458, %v544
        %546 = vmatmul.f32.gmra.mxu0 %v483
        %v547 = vpop.f32.mrf.mxu0
        %v548 = vadd.f32 %v458, %v547
        %549 = vmatmul.f32.gmra.mxu0 %v486
        %v550 = vpop.f32.mrf.mxu0
        %v551 = vadd.f32 %v458, %v550
        %552 = vmatmul.f32.gmra.mxu0 %v489
        %v553 = vpop.f32.mrf.mxu0
        %v554 = vadd.f32 %v458, %v553
        %555 = vmatmul.f32.gmra.mxu0 %v492
        %v556 = vpop.f32.mrf.mxu0
        %v557 = vadd.f32 %v458, %v556
        %558 = vmatmul.f32.gmra.mxu0 %v495
        %v559 = vpop.f32.mrf.mxu0
        %v560 = vadd.f32 %v458, %v559
        %561 = vmatmul.f32.gmra.mxu0 %v498
        %v562 = vpop.f32.mrf.mxu0
        %v563 = vadd.f32 %v458, %v562
        %564 = vmatmul.f32.gmra.mxu0 %v501
        %v565 = vpop.f32.mrf.mxu0
        %v566 = vadd.f32 %v458, %v565
        %567 = vmatmul.f32.gmra.mxu0 %v504
        %v568 = vpop.f32.mrf.mxu0
        %v569 = vadd.f32 %v458, %v568
        %570 = vmatmul.f32.gmra.mxu0 %v507
        %v571 = vpop.f32.mrf.mxu0
        %v572 = vadd.f32 %v458, %v571
        %573 = vdwg.mxu0
        %v574 = vmax.f32 %v527, 0.0
        %v575 = vmax.f32 %v530, 0.0
        %v576 = vmax.f32 %v533, 0.0
        %v577 = vmax.f32 %v536, 0.0
        %v578 = vmax.f32 %v539, 0.0
        %v579 = vmax.f32 %v542, 0.0
        %v580 = vmax.f32 %v545, 0.0
        %v581 = vmax.f32 %v548, 0.0
        %v582 = vmax.f32 %v551, 0.0
        %v583 = vmax.f32 %v554, 0.0
        %v584 = vmax.f32 %v557, 0.0
        %v585 = vmax.f32 %v560, 0.0
        %v586 = vmax.f32 %v563, 0.0
        %v587 = vmax.f32 %v566, 0.0
        %v588 = vmax.f32 %v569, 0.0
        %v589 = vmax.f32 %v572, 0.0
        %v590 = vld [vmem:[%s5] sm:$0xff]
        %v591 = vld [vmem:[%s5 + $0x8] sm:$0xff]
        %v592 = vld [vmem:[%s6] sm:$0x1]
        %v594 = vperm.slane %v592, 0
        %v597 = vsel %vm322, %v574, 0
        %v600 = vsel %vm322, %v575, 0
        %v603 = vsel %vm322, %v576, 0
        %v606 = vsel %vm322, %v577, 0
        %v609 = vsel %vm322, %v578, 0
        %v612 = vsel %vm322, %v579, 0
        %v615 = vsel %vm322, %v580, 0
        %v618 = vsel %vm322, %v581, 0
        %v621 = vsel %vm322, %v582, 0
        %v624 = vsel %vm322, %v583, 0
        %v627 = vsel %vm322, %v584, 0
        %v630 = vsel %vm322, %v585, 0
        %v633 = vsel %vm322, %v586, 0
        %v636 = vsel %vm322, %v587, 0
        %v639 = vsel %vm322, %v588, 0
        %v642 = vsel %vm322, %v589, 0
        %644 = vmatpush.msra.mxu0 0.0
        %645 = vmatpush.msra.mxu0 0.0
        %646 = vmatpush.msra.mxu0 0.0
        %647 = vmatpush.msra.mxu0 0.0
        %648 = vmatpush.msra.mxu0 0.0
        %649 = vmatpush.msra.mxu0 0.0
        %650 = vmatpush.msra.mxu0 0.0
        %651 = vmatpush.msra.mxu0 0.0
        %652 = vmatpush.msra.mxu0 0.0
        %653 = vmatpush.msra.mxu0 0.0
        %654 = vmatpush.msra.mxu0 0.0
        %655 = vmatpush.msra.mxu0 0.0
        %656 = vmatpush.msra.mxu0 0.0
        %657 = vmatpush.msra.mxu0 0.0
        %658 = vmatpush.msra.mxu0 %v591
        %659 = vmatpush.msra.mxu0 %v590
        %660 = vmatmul.f32.gmra.mxu0 %v597
        %v661 = vpop.f32.mrf.mxu0
        %v662 = vadd.f32 %v594, %v661
        %663 = vmatmul.f32.gmra.mxu0 %v600
        %v664 = vpop.f32.mrf.mxu0
        %v665 = vadd.f32 %v594, %v664
        %666 = vmatmul.f32.gmra.mxu0 %v603
        %v667 = vpop.f32.mrf.mxu0
        %v668 = vadd.f32 %v594, %v667
        %669 = vmatmul.f32.gmra.mxu0 %v606
        %v670 = vpop.f32.mrf.mxu0
        %v671 = vadd.f32 %v594, %v670
        %672 = vmatmul.f32.gmra.mxu0 %v609
        %v673 = vpop.f32.mrf.mxu0
        %v674 = vadd.f32 %v594, %v673
        %675 = vmatmul.f32.gmra.mxu0 %v612
        %v676 = vpop.f32.mrf.mxu0
        %v677 = vadd.f32 %v594, %v676
        %678 = vmatmul.f32.gmra.mxu0 %v615
        %v679 = vpop.f32.mrf.mxu0
        %v680 = vadd.f32 %v594, %v679
        %681 = vmatmul.f32.gmra.mxu0 %v618
        %v682 = vpop.f32.mrf.mxu0
        %v683 = vadd.f32 %v594, %v682
        %684 = vmatmul.f32.gmra.mxu0 %v621
        %v685 = vpop.f32.mrf.mxu0
        %v686 = vadd.f32 %v594, %v685
        %687 = vmatmul.f32.gmra.mxu0 %v624
        %v688 = vpop.f32.mrf.mxu0
        %v689 = vadd.f32 %v594, %v688
        %690 = vmatmul.f32.gmra.mxu0 %v627
        %v691 = vpop.f32.mrf.mxu0
        %v692 = vadd.f32 %v594, %v691
        %693 = vmatmul.f32.gmra.mxu0 %v630
        %v694 = vpop.f32.mrf.mxu0
        %v695 = vadd.f32 %v594, %v694
        %696 = vmatmul.f32.gmra.mxu0 %v633
        %v697 = vpop.f32.mrf.mxu0
        %v698 = vadd.f32 %v594, %v697
        %699 = vmatmul.f32.gmra.mxu0 %v636
        %v700 = vpop.f32.mrf.mxu0
        %v701 = vadd.f32 %v594, %v700
        %702 = vmatmul.f32.gmra.mxu0 %v639
        %v703 = vpop.f32.mrf.mxu0
        %v704 = vadd.f32 %v594, %v703
        %705 = vmatmul.f32.gmra.mxu0 %v642
        %v706 = vpop.f32.mrf.mxu0
        %v707 = vadd.f32 %v594, %v706
        %708 = vdwg.mxu0
        %vm709 = vcmask 31744
        %710 = vst.msk [vmem:[%s280] sm:$0xff] %vm709, %v662
        %711 = vst.msk [vmem:[%s280 + $0x8] sm:$0xff] %vm709, %v665
        %712 = vst.msk [vmem:[%s280 + $0x10] sm:$0xff] %vm709, %v668
        %713 = vst.msk [vmem:[%s280 + $0x18] sm:$0xff] %vm709, %v671
        %714 = vst.msk [vmem:[%s280 + $0x20] sm:$0xff] %vm709, %v674
        %715 = vst.msk [vmem:[%s280 + $0x28] sm:$0xff] %vm709, %v677
        %716 = vst.msk [vmem:[%s280 + $0x30] sm:$0xff] %vm709, %v680
        %717 = vst.msk [vmem:[%s280 + $0x38] sm:$0xff] %vm709, %v683
        %718 = vst.msk [vmem:[%s280 + $0x40] sm:$0xff] %vm709, %v686
        %719 = vst.msk [vmem:[%s280 + $0x48] sm:$0xff] %vm709, %v689
        %720 = vst.msk [vmem:[%s280 + $0x50] sm:$0xff] %vm709, %v692
        %721 = vst.msk [vmem:[%s280 + $0x58] sm:$0xff] %vm709, %v695
        %722 = vst.msk [vmem:[%s280 + $0x60] sm:$0xff] %vm709, %v698
        %723 = vst.msk [vmem:[%s280 + $0x68] sm:$0xff] %vm709, %v701
        %724 = vst.msk [vmem:[%s280 + $0x70] sm:$0xff] %vm709, %v704
        %725 = vst.msk [vmem:[%s280 + $0x78] sm:$0xff] %vm709, %v707
        %s726 = sand.u32 %s178, 1
        %s727 = sand.u32 %s178, 1
        %s728 = smul.addr %s727, 128
        %s729 = scalar_lea.vmem [#allocation2], %s728
        // Predicated region
        $region49: #{tpu_custom_call.1} parent=47 // pred_check
          %p730 = pneg %p188
        $region50: #{tpu_custom_call.1} parent=47 // pred_check_branch
          %732 = sbr.rel (%p730) target = $region52
        $region51: #{tpu_custom_call.1} parent=47 // pred_region
          %s733 = smul.u32 16, %s18
          %s734 = ssub.s32 38, %s733
          %p735 = scmp.lt.s32.totalorder %s734, 16
          %s736 = scalar_select %p735, %s734, 16
          %s737 = smul.u32 8, %s736
          %p738 = scmp.ne.s32.totalorder 0, %s737
          %s739 = smul.addr %s733, 8
          %s740 = scalar_lea.vmem %s7, %s739
          // Predicated region
          $region53: #{tpu_custom_call.1} parent=51 // pred_check
            %p741 = pneg %p738
          $region54: #{tpu_custom_call.1} parent=51 // pred_check_branch
            %743 = sbr.rel (%p741) target = $region56
          $region55: #{tpu_custom_call.1} parent=51 // pred_region
            // Predicated region
            $region57: #{tpu_custom_call.1} parent=55 // pred_check
              _
            $region58: #{tpu_custom_call.1} parent=55 // pred_check_branch
              %745 = sbr.rel (0) target = $region60
            $region59: #{tpu_custom_call.1} parent=55 // pred_region
              // Predicated region
              $region79: #{tpu_custom_call.1} parent=59 // pred_check
                _
              $region80: #{tpu_custom_call.1} parent=59 // pred_check_branch
                %825 = sbr.rel (0) target = $region82
              $region81: #{tpu_custom_call.1} parent=59 // pred_region
                %s826 = sshrl.u32 %s736, 4
                // While loop
                $region83: #{tpu_custom_call.1} parent=81 // loop_pre_header
                  _
                $region84: #{tpu_custom_call.1} parent=81 // loop_header
                  %s828 = sphi 0, %s830
                  %p829 = scmp.ge.s32.totalorder %s828, %s826
                  %s833 = sphi 0, %s870
                  %s834 = sphi %s729, %s873
                  %s835 = sphi %s740, %s874
                $region85: #{tpu_custom_call.1} parent=81 // loop_header_branch
                  %832 = sbr.rel (%p829) target = $region89
                $region86: #{tpu_custom_call.1} parent=81 // loop_body
                  %v836 = vld [vmem:[%s834] sm:$0xff]
                  %837 = vst [vmem:[%s835] sm:$0xff] %v836
                  %v838 = vld [vmem:[%s834 + $0x8] sm:$0xff]
                  %839 = vst [vmem:[%s835 + $0x8] sm:$0xff] %v838
                  %v840 = vld [vmem:[%s834 + $0x10] sm:$0xff]
                  %841 = vst [vmem:[%s835 + $0x10] sm:$0xff] %v840
                  %v842 = vld [vmem:[%s834 + $0x18] sm:$0xff]
                  %843 = vst [vmem:[%s835 + $0x18] sm:$0xff] %v842
                  %v844 = vld [vmem:[%s834 + $0x20] sm:$0xff]
                  %845 = vst [vmem:[%s835 + $0x20] sm:$0xff] %v844
                  %v846 = vld [vmem:[%s834 + $0x28] sm:$0xff]
                  %847 = vst [vmem:[%s835 + $0x28] sm:$0xff] %v846
                  %v848 = vld [vmem:[%s834 + $0x30] sm:$0xff]
                  %849 = vst [vmem:[%s835 + $0x30] sm:$0xff] %v848
                  %v850 = vld [vmem:[%s834 + $0x38] sm:$0xff]
                  %851 = vst [vmem:[%s835 + $0x38] sm:$0xff] %v850
                  %v852 = vld [vmem:[%s834 + $0x40] sm:$0xff]
                  %853 = vst [vmem:[%s835 + $0x40] sm:$0xff] %v852
                  %v854 = vld [vmem:[%s834 + $0x48] sm:$0xff]
                  %855 = vst [vmem:[%s835 + $0x48] sm:$0xff] %v854
                  %v856 = vld [vmem:[%s834 + $0x50] sm:$0xff]
                  %857 = vst [vmem:[%s835 + $0x50] sm:$0xff] %v856
                  %v858 = vld [vmem:[%s834 + $0x58] sm:$0xff]
                  %859 = vst [vmem:[%s835 + $0x58] sm:$0xff] %v858
                  %v860 = vld [vmem:[%s834 + $0x60] sm:$0xff]
                  %861 = vst [vmem:[%s835 + $0x60] sm:$0xff] %v860
                  %v862 = vld [vmem:[%s834 + $0x68] sm:$0xff]
                  %863 = vst [vmem:[%s835 + $0x68] sm:$0xff] %v862
                  %v864 = vld [vmem:[%s834 + $0x70] sm:$0xff]
                  %865 = vst [vmem:[%s835 + $0x70] sm:$0xff] %v864
                  %v866 = vld [vmem:[%s834 + $0x78] sm:$0xff]
                  %867 = vst [vmem:[%s835 + $0x78] sm:$0xff] %v866
                  %s868 = sadd.s32 1, %s833
                  %p869 = scmp.ge.s32.totalorder %s868, %s826
                  %s870 = scalar_select %p869, 0, %s868
                  %s871 = smul.u32 %s870, 128
                  %s872 = smul.u32 %s870, 128
                  %s873 = scalar_lea.vmem %s729, %s871 [#allocation2]
                  %s874 = scalar_lea.vmem %s740, %s872
                $region87: #{tpu_custom_call.1} parent=81 // loop_footer
                  %s830 = sadd.s32 %s828, 1
                $region88: #{tpu_custom_call.1} parent=81 // loop_footer_branch
                  %827 = sbr.rel target = $region84
                $region89: #{tpu_custom_call.1} parent=81 // loop_exit
                  _
                %s875 = sshrl.u32 %s736, 4
                %s876 = sand.u32 %s736, 15
                %s877 = smul.u32 %s875, 16
                %s878 = smul.u32 8, %s877
                %s879 = scalar_lea.vmem %s729, %s878 [#allocation2]
                %s880 = smul.u32 8, %s877
                %s881 = scalar_lea.vmem %s740, %s880
                // While loop
                $region90: #{tpu_custom_call.1} parent=81 // loop_pre_header
                  _
                $region91: #{tpu_custom_call.1} parent=81 // loop_header
                  %s883 = sphi 0, %s885
                  %p884 = scmp.ge.s32.totalorder %s883, %s876
                  %s888 = sphi 0, %s895
                  %s889 = sphi %s879, %s898
                  %s890 = sphi %s881, %s899
                $region92: #{tpu_custom_call.1} parent=81 // loop_header_branch
                  %887 = sbr.rel (%p884) target = $region96
                $region93: #{tpu_custom_call.1} parent=81 // loop_body
                  %v891 = vld [vmem:[%s889] sm:$0xff]
                  %892 = vst [vmem:[%s890] sm:$0xff] %v891
                  %s893 = sadd.s32 1, %s888
                  %p894 = scmp.ge.s32.totalorder %s893, %s876
                  %s895 = scalar_select %p894, 0, %s893
                  %s896 = smul.u32 %s895, 8
                  %s897 = smul.u32 %s895, 8
                  %s898 = scalar_lea.vmem %s879, %s896 [#allocation2]
                  %s899 = scalar_lea.vmem %s881, %s897
                $region94: #{tpu_custom_call.1} parent=81 // loop_footer
                  %s885 = sadd.s32 %s883, 1
                $region95: #{tpu_custom_call.1} parent=81 // loop_footer_branch
                  %882 = sbr.rel target = $region91
                $region96: #{tpu_custom_call.1} parent=81 // loop_exit
                  _
              $region82: #{tpu_custom_call.1} parent=59 // pred_fallthru
                _
              // Predicated region
              $region97: #{tpu_custom_call.1} parent=59 // pred_check
                _
              $region98: #{tpu_custom_call.1} parent=59 // pred_check_branch
                %901 = sbr.rel target = $region100
              $region99: #{tpu_custom_call.1} parent=59 // pred_region
                _
              $region100: #{tpu_custom_call.1} parent=59 // pred_fallthru
                _
            $region60: #{tpu_custom_call.1} parent=55 // pred_fallthru
              _
            // Predicated region
            $region61: #{tpu_custom_call.1} parent=55 // pred_check
              _
            $region62: #{tpu_custom_call.1} parent=55 // pred_check_branch
              %747 = sbr.rel target = $region64
            $region63: #{tpu_custom_call.1} parent=55 // pred_region
              %s749 = ssub.s32 256, 1
              %s750 = sshrl.u32 %s736, 4
              // While loop
              $region65: #{tpu_custom_call.1} parent=63 // loop_pre_header
                _
              $region66: #{tpu_custom_call.1} parent=63 // loop_header
                %s752 = sphi 0, %s754
                %p753 = scmp.ge.s32.totalorder %s752, %s750
                %s757 = sphi 0, %s794
                %s758 = sphi %s729, %s797
                %s759 = sphi %s740, %s798
              $region67: #{tpu_custom_call.1} parent=63 // loop_header_branch
                %756 = sbr.rel (%p753) target = $region71
              $region68: #{tpu_custom_call.1} parent=63 // loop_body
                %v760 = vld [vmem:[%s758] sm:%s749]
                %761 = vst [vmem:[%s759] sm:%s749] %v760
                %v762 = vld [vmem:[%s758 + $0x8] sm:%s749]
                %763 = vst [vmem:[%s759 + $0x8] sm:%s749] %v762
                %v764 = vld [vmem:[%s758 + $0x10] sm:%s749]
                %765 = vst [vmem:[%s759 + $0x10] sm:%s749] %v764
                %v766 = vld [vmem:[%s758 + $0x18] sm:%s749]
                %767 = vst [vmem:[%s759 + $0x18] sm:%s749] %v766
                %v768 = vld [vmem:[%s758 + $0x20] sm:%s749]
                %769 = vst [vmem:[%s759 + $0x20] sm:%s749] %v768
                %v770 = vld [vmem:[%s758 + $0x28] sm:%s749]
                %771 = vst [vmem:[%s759 + $0x28] sm:%s749] %v770
                %v772 = vld [vmem:[%s758 + $0x30] sm:%s749]
                %773 = vst [vmem:[%s759 + $0x30] sm:%s749] %v772
                %v774 = vld [vmem:[%s758 + $0x38] sm:%s749]
                %775 = vst [vmem:[%s759 + $0x38] sm:%s749] %v774
                %v776 = vld [vmem:[%s758 + $0x40] sm:%s749]
                %777 = vst [vmem:[%s759 + $0x40] sm:%s749] %v776
                %v778 = vld [vmem:[%s758 + $0x48] sm:%s749]
                %779 = vst [vmem:[%s759 + $0x48] sm:%s749] %v778
                %v780 = vld [vmem:[%s758 + $0x50] sm:%s749]
                %781 = vst [vmem:[%s759 + $0x50] sm:%s749] %v780
                %v782 = vld [vmem:[%s758 + $0x58] sm:%s749]
                %783 = vst [vmem:[%s759 + $0x58] sm:%s749] %v782
                %v784 = vld [vmem:[%s758 + $0x60] sm:%s749]
                %785 = vst [vmem:[%s759 + $0x60] sm:%s749] %v784
                %v786 = vld [vmem:[%s758 + $0x68] sm:%s749]
                %787 = vst [vmem:[%s759 + $0x68] sm:%s749] %v786
                %v788 = vld [vmem:[%s758 + $0x70] sm:%s749]
                %789 = vst [vmem:[%s759 + $0x70] sm:%s749] %v788
                %v790 = vld [vmem:[%s758 + $0x78] sm:%s749]
                %791 = vst [vmem:[%s759 + $0x78] sm:%s749] %v790
                %s792 = sadd.s32 1, %s757
                %p793 = scmp.ge.s32.totalorder %s792, %s750
                %s794 = scalar_select %p793, 0, %s792
                %s795 = smul.u32 %s794, 128
                %s796 = smul.u32 %s794, 128
                %s797 = scalar_lea.vmem %s729, %s795 [#allocation2]
                %s798 = scalar_lea.vmem %s740, %s796
              $region69: #{tpu_custom_call.1} parent=63 // loop_footer
                %s754 = sadd.s32 %s752, 1
              $region70: #{tpu_custom_call.1} parent=63 // loop_footer_branch
                %751 = sbr.rel target = $region66
              $region71: #{tpu_custom_call.1} parent=63 // loop_exit
                _
              %s799 = sshrl.u32 %s736, 4
              %s800 = sand.u32 %s736, 15
              %s801 = smul.u32 %s799, 16
              %s802 = smul.u32 8, %s801
              %s803 = scalar_lea.vmem %s729, %s802 [#allocation2]
              %s804 = smul.u32 8, %s801
              %s805 = scalar_lea.vmem %s740, %s804
              // While loop
              $region72: #{tpu_custom_call.1} parent=63 // loop_pre_header
                _
              $region73: #{tpu_custom_call.1} parent=63 // loop_header
                %s807 = sphi 0, %s809
                %p808 = scmp.ge.s32.totalorder %s807, %s800
                %s812 = sphi 0, %s819
                %s813 = sphi %s803, %s822
                %s814 = sphi %s805, %s823
              $region74: #{tpu_custom_call.1} parent=63 // loop_header_branch
                %811 = sbr.rel (%p808) target = $region78
              $region75: #{tpu_custom_call.1} parent=63 // loop_body
                %v815 = vld [vmem:[%s813] sm:%s749]
                %816 = vst [vmem:[%s814] sm:%s749] %v815
                %s817 = sadd.s32 1, %s812
                %p818 = scmp.ge.s32.totalorder %s817, %s800
                %s819 = scalar_select %p818, 0, %s817
                %s820 = smul.u32 %s819, 8
                %s821 = smul.u32 %s819, 8
                %s822 = scalar_lea.vmem %s803, %s820 [#allocation2]
                %s823 = scalar_lea.vmem %s805, %s821
              $region76: #{tpu_custom_call.1} parent=63 // loop_footer
                %s809 = sadd.s32 %s807, 1
              $region77: #{tpu_custom_call.1} parent=63 // loop_footer_branch
                %806 = sbr.rel target = $region73
              $region78: #{tpu_custom_call.1} parent=63 // loop_exit
                _
            $region64: #{tpu_custom_call.1} parent=55 // pred_fallthru
              _
          $region56: #{tpu_custom_call.1} parent=51 // pred_fallthru
            _
          %902 = vnop
        $region52: #{tpu_custom_call.1} parent=47 // pred_fallthru
          _
      $region48: #{tpu_custom_call.1} parent=5 // pred_fallthru
        _
      %p903 = scmp.le.s32.totalorder 2, %s13
      // Predicated region
      $region101: #{tpu_custom_call.1} parent=5 // pred_check
        %p904 = pneg %p903
      $region102: #{tpu_custom_call.1} parent=5 // pred_check_branch
        %906 = sbr.rel (%p904) target = $region104
      $region103: #{tpu_custom_call.1} parent=5 // pred_region
        %s907 = ssub.s32 %s13, 2
        // Predicated region
        $region105: #{tpu_custom_call.1} parent=103 // pred_check
          %p908 = pneg %p194
        $region106: #{tpu_custom_call.1} parent=103 // pred_check_branch
          %910 = sbr.rel (%p908) target = $region108
        $region107: #{tpu_custom_call.1} parent=103 // pred_region
          %s911 = sand.u32 %s179, 1
          %s912 = sand.u32 %s179, 1
          %s913 = smul.addr %s912, 128
          %s914 = scalar_lea.vmem [#allocation2], %s913
        $region108: #{tpu_custom_call.1} parent=103 // pred_fallthru
          _
      $region104: #{tpu_custom_call.1} parent=5 // pred_fallthru
        _
    $region6: #{tpu_custom_call.1} parent=1 // loop_footer
      %s17 = sadd.s32 1, %s13
    $region7: #{tpu_custom_call.1} parent=1 // loop_footer_branch
      %12 = sbr.rel target = $region3
    $region8: #{tpu_custom_call.1} parent=1 // loop_exit
      _

</llo_original>
